<compile_context>
chip_gen: v7x
topology: tpu7x:2x2x1
jax: 0.10.0
libtpu: 0.0.40
codegen_flags: <defaults>
</compile_context>

<pallas_src>
import functools
import math

import jax
import jax.numpy as jnp
from jax.experimental import pallas as pl
from jax.experimental.pallas import tpu as pltpu

NEG_SLOPE = 0.01    # F.leaky_relu default
HIDDEN = 100        # logical hidden width
HIDDEN_PAD = 128    # lane-dense hidden width
OUT = 32            # per-branch output width (stored exactly, no padding)
TM_CAP = 2048       # row-tile cap (sweepable 1024-4096; 2048 is safe everywhere)


def _leaky_relu(v):
    return jnp.where(v > 0, v, NEG_SLOPE * v)


def _round_up(n, m):
    return ((n + m - 1) // m) * m


def _backbone_kernel(t_ref, x_ref,
                     wt1_ref, bt1_ref, wx1_ref, bx1_ref,
                     w2t_ref, bt2_ref, w2x_ref, bx2_ref,
                     t_out_ref, x_out_ref, *, t_dim):
    """Fused T_module + X_module forward for one row tile.

    Layer 1: [tm, d] -> [tm, 128] (VPU broadcast for d==1, MXU otherwise),
             bias add, leaky_relu.
    Layer 2: [tm, 128] @ [128, 32] per branch on the MXU, bias, leaky_relu,
             stored straight into two exact-width [tm, 32] outputs.
    """
    if t_dim == 1:
        # K=1 matmul as a VPU broadcast outer product: (tm,1) * (1,128).
        h_t = t_ref[...].astype(jnp.float32) * wt1_ref[...].astype(jnp.float32)
    else:
        h_t = jnp.dot(t_ref[...], wt1_ref[...],
                      preferred_element_type=jnp.float32)
    h_t = _leaky_relu(h_t + bt1_ref[...])

    h_x = jnp.dot(x_ref[...], wx1_ref[...],
                  preferred_element_type=jnp.float32)
    h_x = _leaky_relu(h_x + bx1_ref[...])

    o_t = jnp.dot(h_t.astype(w2t_ref.dtype), w2t_ref[...],
                  preferred_element_type=jnp.float32) + bt2_ref[...]
    t_out_ref[...] = _leaky_relu(o_t).astype(t_out_ref.dtype)

    o_x = jnp.dot(h_x.astype(w2x_ref.dtype), w2x_ref[...],
                  preferred_element_type=jnp.float32) + bx2_ref[...]
    x_out_ref[...] = _leaky_relu(o_x).astype(x_out_ref.dtype)


def _init_linear(key, fan_in, fan_out):
    # Deterministic init mimicking nn.Linear default (uniform +-1/sqrt(fan_in)).
    kw, kb = jax.random.split(key)
    bound = 1.0 / math.sqrt(fan_in)
    # Stored transposed: [in, out].
    w = jax.random.uniform(kw, (fan_in, fan_out), jnp.float32, -bound, bound)
    b = jax.random.uniform(kb, (1, fan_out), jnp.float32, -bound, bound)
    return w, b


def _pad2(a, rows, cols):
    out = jnp.zeros((rows, cols), jnp.float32)
    return out.at[: a.shape[0], : a.shape[1]].set(a)


class BackboneModulePallas:
    """JAX/Pallas equivalent of Backbone_module(t_dim, x_dim, size)."""

    def __init__(self, t_dim, x_dim, size, key,
                 compute_dtype=jnp.float32, out_dtype=jnp.float32):
        self.t_dim = t_dim
        self.x_dim = x_dim
        self.size = size  # unused in forward (matches PyTorch module)
        self.compute_dtype = compute_dtype
        self.out_dtype = out_dtype

        k1, k2, k3, k4 = jax.random.split(key, 4)
        # T_module: Linear(t_dim, 100) -> Linear(100, 32)
        t_w1, t_b1 = _init_linear(k1, t_dim, HIDDEN)
        t_w2, t_b2 = _init_linear(k2, HIDDEN, OUT)
        # X_module: Linear(x_dim, 100) -> Linear(100, 32)
        x_w1, x_b1 = _init_linear(k3, x_dim, HIDDEN)
        x_w2, x_b2 = _init_linear(k4, HIDDEN, OUT)

        # Unpadded f32 copies (kept for the reference check / export).
        self.t_w1, self.t_b1, self.t_w2, self.t_b2 = t_w1, t_b1, t_w2, t_b2
        self.x_w1, self.x_b1, self.x_w2, self.x_b2 = x_w1, x_b1, x_w2, x_b2

        # --- pre-padded lane-dense parameters (hoisted out of forward) ------
        cd = compute_dtype
        # Layer 1: pad hidden 100 -> 128 (zero cols -> h[:,100:128] == 0).
        self.wt1_p = _pad2(t_w1, t_dim, HIDDEN_PAD).astype(cd)
        self.bt1_p = _pad2(t_b1, 1, HIDDEN_PAD)                  # bias stays f32
        self.wx1_p = _pad2(x_w1, x_dim, HIDDEN_PAD).astype(cd)
        self.bx1_p = _pad2(x_b1, 1, HIDDEN_PAD)
        # Layer 2: pad K 100 -> 128 (zero rows), exact 32-wide outputs.
        self.w2t_p = _pad2(t_w2, HIDDEN_PAD, OUT).astype(cd)
        self.bt2_p = t_b2                                        # (1, 32) f32
        self.w2x_p = _pad2(x_w2, HIDDEN_PAD, OUT).astype(cd)
        self.bx2_p = x_b2                                        # (1, 32) f32

        self._kernel = functools.partial(_backbone_kernel, t_dim=t_dim)

    def __call__(self, t, x):
        if t.ndim == 1:
            t = t.reshape(-1, 1)
        n = t.shape[0]
        assert x.shape[0] == n

        # Row tile: ~ceil(N/2) rounded up to 8 (keeps >= 2 grid steps so both
        # v7x TensorCores get work), capped at TM_CAP.  At tm=2048 the
        # double-buffered tiles + f32 intermediates are only a few MiB —
        # far under the scoped-VMEM default on v5e/v6e/v7x.
        tm = min(TM_CAP, max(8, _round_up(-(-n // 2), 8)))
        grid = (pl.cdiv(n, tm),)   # partial last block is masked by the pipeline

        cd = self.compute_dtype
        t_in = t.astype(cd)
        x_in = x.astype(cd)

        t_out, x_out = pl.pallas_call(
            self._kernel,
            out_shape=(jax.ShapeDtypeStruct((n, OUT), self.out_dtype),
                       jax.ShapeDtypeStruct((n, OUT), self.out_dtype)),
            grid=grid,
            in_specs=[
                # activations: tiled along the batch axis (double-buffered)
                pl.BlockSpec((tm, self.t_dim), lambda i: (i, 0)),
                pl.BlockSpec((tm, self.x_dim), lambda i: (i, 0)),
                # parameters: constant index_map -> fetched once, VMEM-resident
                # (the pipeline skips re-DMA for unchanged block indices)
                pl.BlockSpec((self.t_dim, HIDDEN_PAD), lambda i: (0, 0)),
                pl.BlockSpec((1, HIDDEN_PAD), lambda i: (0, 0)),
                pl.BlockSpec((self.x_dim, HIDDEN_PAD), lambda i: (0, 0)),
                pl.BlockSpec((1, HIDDEN_PAD), lambda i: (0, 0)),
                pl.BlockSpec((HIDDEN_PAD, OUT), lambda i: (0, 0)),
                pl.BlockSpec((1, OUT), lambda i: (0, 0)),
                pl.BlockSpec((HIDDEN_PAD, OUT), lambda i: (0, 0)),
                pl.BlockSpec((1, OUT), lambda i: (0, 0)),
            ],
            # exact-width outputs: no zero columns, no wrapper re-slice
            out_specs=(pl.BlockSpec((tm, OUT), lambda i: (i, 0)),
                       pl.BlockSpec((tm, OUT), lambda i: (i, 0))),
            compiler_params=pltpu.CompilerParams(
                dimension_semantics=("parallel",)),
        )(t_in, x_in,
          self.wt1_p, self.bt1_p, self.wx1_p, self.bx1_p,
          self.w2t_p, self.bt2_p, self.w2x_p, self.bx2_p)

        return t_out, x_out


# Plain-JAX reference (mirrors the PyTorch forward exactly).
def _ref_mlp(inp, w1, b1, w2, b2):
    h = inp @ w1 + b1
    h = jnp.where(h > 0, h, NEG_SLOPE * h)
    o = h @ w2 + b2
    return jnp.where(o > 0, o, NEG_SLOPE * o)


if __name__ == "__main__":
    key = jax.random.PRNGKey(0)
    k_params, k_t, k_x, k_t2, k_x2 = jax.random.split(key, 5)

    t_dim = 1
    x_dim = 4
    size = 16  # unused by forward

    model = BackboneModulePallas(t_dim, x_dim, size, k_params)

    # --- small batch (t is 1-D like treatment scalars -> reshaped to [N, 1]) --
    batch = 8
    t = jax.random.normal(k_t, (batch,), jnp.float32)
    x = jax.random.normal(k_x, (batch, x_dim), jnp.float32)

    t_tmp, x_tmp = model(t, x)
    jax.block_until_ready((t_tmp, x_tmp))
    assert t_tmp.shape == (batch, OUT)
    assert x_tmp.shape == (batch, OUT)

    t_ref = _ref_mlp(t.reshape(-1, 1), model.t_w1, model.t_b1,
                     model.t_w2, model.t_b2)
    x_ref = _ref_mlp(x, model.x_w1, model.x_b1, model.x_w2, model.x_b2)
    assert jnp.allclose(t_tmp, t_ref, atol=1e-4)
    assert jnp.allclose(x_tmp, x_ref, atol=1e-4)

    # --- larger batch: exercises the multi-tile grid + masked partial block ---
    batch2 = 600  # -> tm=304, grid=(2,), last block partially masked
    t2 = jax.random.normal(k_t2, (batch2,), jnp.float32)
    x2 = jax.random.normal(k_x2, (batch2, x_dim), jnp.float32)
    t2_tmp, x2_tmp = model(t2, x2)
    jax.block_until_ready((t2_tmp, x2_tmp))
    assert t2_tmp.shape == (batch2, OUT)
    assert x2_tmp.shape == (batch2, OUT)
    t2_ref = _ref_mlp(t2.reshape(-1, 1), model.t_w1, model.t_b1,
                      model.t_w2, model.t_b2)
    x2_ref = _ref_mlp(x2, model.x_w1, model.x_b1, model.x_w2, model.x_b2)
    assert jnp.allclose(t2_tmp, t2_ref, atol=1e-4)
    assert jnp.allclose(x2_tmp, x2_ref, atol=1e-4)

    print("KERNEL_OK")
</pallas_src>

<mosaic_0001>
module attributes {stable_mosaic.version = 11 : i64} {
  func.func @_backbone_kernel(%arg0: i32, %arg1: memref<8x1xf32, #tpu.memory_space<vmem>>, %arg2: memref<8x4xf32, #tpu.memory_space<vmem>>, %arg3: memref<1x128xf32, #tpu.memory_space<vmem>>, %arg4: memref<1x128xf32, #tpu.memory_space<vmem>>, %arg5: memref<4x128xf32, #tpu.memory_space<vmem>>, %arg6: memref<1x128xf32, #tpu.memory_space<vmem>>, %arg7: memref<128x32xf32, #tpu.memory_space<vmem>>, %arg8: memref<1x32xf32, #tpu.memory_space<vmem>>, %arg9: memref<128x32xf32, #tpu.memory_space<vmem>>, %arg10: memref<1x32xf32, #tpu.memory_space<vmem>>, %arg11: memref<8x32xf32, #tpu.memory_space<vmem>>, %arg12: memref<8x32xf32, #tpu.memory_space<vmem>>) attributes {dimension_semantics = [#tpu.dimension_semantics<parallel>], iteration_bounds = array<i64: 1>, scalar_prefetch = 0 : i64, scratch_operands = 0 : i64, tpu.core_type = #tpu.core_type<tc>, window_params = [{transform_indices = @transform_0, window_bounds = array<i64: 8, 1>}, {transform_indices = @transform_1, window_bounds = array<i64: 8, 4>}, {pipeline_mode = #tpu.pipeline_mode<synchronous>, transform_indices = @transform_2, window_bounds = array<i64: 1, 128>}, {pipeline_mode = #tpu.pipeline_mode<synchronous>, transform_indices = @transform_3, window_bounds = array<i64: 1, 128>}, {pipeline_mode = #tpu.pipeline_mode<synchronous>, transform_indices = @transform_4, window_bounds = array<i64: 4, 128>}, {pipeline_mode = #tpu.pipeline_mode<synchronous>, transform_indices = @transform_5, window_bounds = array<i64: 1, 128>}, {pipeline_mode = #tpu.pipeline_mode<synchronous>, transform_indices = @transform_6, window_bounds = array<i64: 128, 32>}, {pipeline_mode = #tpu.pipeline_mode<synchronous>, transform_indices = @transform_7, window_bounds = array<i64: 1, 32>}, {pipeline_mode = #tpu.pipeline_mode<synchronous>, transform_indices = @transform_8, window_bounds = array<i64: 128, 32>}, {pipeline_mode = #tpu.pipeline_mode<synchronous>, transform_indices = @transform_9, window_bounds = array<i64: 1, 32>}, {transform_indices = @transform_10, window_bounds = array<i64: 8, 32>}, {transform_indices = @transform_11, window_bounds = array<i64: 8, 32>}]} {
    %c0 = arith.constant 0 : index
    %c0_0 = arith.constant 0 : index
    %0 = vector.load %arg1[%c0, %c0_0] : memref<8x1xf32, #tpu.memory_space<vmem>>, vector<8x1xf32>
    %c0_1 = arith.constant 0 : index
    %c0_2 = arith.constant 0 : index
    %1 = vector.load %arg3[%c0_1, %c0_2] : memref<1x128xf32, #tpu.memory_space<vmem>>, vector<1x128xf32>
    %2 = vector.broadcast %0 : vector<8x1xf32> to vector<8x128xf32>
    %3 = vector.broadcast %1 : vector<1x128xf32> to vector<8x128xf32>
    %4 = arith.mulf %2, %3 : vector<8x128xf32>
    %c0_3 = arith.constant 0 : index
    %c0_4 = arith.constant 0 : index
    %5 = vector.load %arg4[%c0_3, %c0_4] : memref<1x128xf32, #tpu.memory_space<vmem>>, vector<1x128xf32>
    %6 = vector.broadcast %5 : vector<1x128xf32> to vector<8x128xf32>
    %7 = arith.addf %4, %6 : vector<8x128xf32>
    %cst = arith.constant 0.000000e+00 : f32
    %8 = vector.broadcast %cst : f32 to vector<8x128xf32>
    %9 = arith.cmpf ogt, %7, %8 : vector<8x128xf32>
    %cst_5 = arith.constant 0.00999999977 : f32
    %10 = vector.broadcast %cst_5 : f32 to vector<8x128xf32>
    %11 = arith.mulf %10, %7 : vector<8x128xf32>
    %12 = arith.select %9, %7, %11 : vector<8x128xi1>, vector<8x128xf32>
    %c0_6 = arith.constant 0 : index
    %c0_7 = arith.constant 0 : index
    %13 = vector.load %arg2[%c0_6, %c0_7] : memref<8x4xf32, #tpu.memory_space<vmem>>, vector<8x4xf32>
    %c0_8 = arith.constant 0 : index
    %c0_9 = arith.constant 0 : index
    %14 = vector.load %arg5[%c0_8, %c0_9] : memref<4x128xf32, #tpu.memory_space<vmem>>, vector<4x128xf32>
    %cst_10 = arith.constant dense<0.000000e+00> : vector<8x128xf32>
    %15 = tpu.matmul %13, %14, %cst_10 {dimension_numbers = #tpu.dot_dimension_numbers<[1], [0], [0], [1], [0, 0, 1, 1], [], []>} : vector<8x4xf32>, vector<4x128xf32>, vector<8x128xf32> -> vector<8x128xf32>
    %c0_11 = arith.constant 0 : index
    %c0_12 = arith.constant 0 : index
    %16 = vector.load %arg6[%c0_11, %c0_12] : memref<1x128xf32, #tpu.memory_space<vmem>>, vector<1x128xf32>
    %17 = vector.broadcast %16 : vector<1x128xf32> to vector<8x128xf32>
    %18 = arith.addf %15, %17 : vector<8x128xf32>
    %cst_13 = arith.constant 0.000000e+00 : f32
    %19 = vector.broadcast %cst_13 : f32 to vector<8x128xf32>
    %20 = arith.cmpf ogt, %18, %19 : vector<8x128xf32>
    %cst_14 = arith.constant 0.00999999977 : f32
    %21 = vector.broadcast %cst_14 : f32 to vector<8x128xf32>
    %22 = arith.mulf %21, %18 : vector<8x128xf32>
    %23 = arith.select %20, %18, %22 : vector<8x128xi1>, vector<8x128xf32>
    %c0_15 = arith.constant 0 : index
    %c0_16 = arith.constant 0 : index
    %24 = vector.load %arg7[%c0_15, %c0_16] : memref<128x32xf32, #tpu.memory_space<vmem>>, vector<128x32xf32>
    %cst_17 = arith.constant dense<0.000000e+00> : vector<8x32xf32>
    %25 = tpu.matmul %12, %24, %cst_17 {dimension_numbers = #tpu.dot_dimension_numbers<[1], [0], [0], [1], [0, 0, 1, 1], [], []>} : vector<8x128xf32>, vector<128x32xf32>, vector<8x32xf32> -> vector<8x32xf32>
    %c0_18 = arith.constant 0 : index
    %c0_19 = arith.constant 0 : index
    %26 = vector.load %arg8[%c0_18, %c0_19] : memref<1x32xf32, #tpu.memory_space<vmem>>, vector<1x32xf32>
    %27 = vector.broadcast %26 : vector<1x32xf32> to vector<8x32xf32>
    %28 = arith.addf %25, %27 : vector<8x32xf32>
    %cst_20 = arith.constant 0.000000e+00 : f32
    %29 = vector.broadcast %cst_20 : f32 to vector<8x32xf32>
    %30 = arith.cmpf ogt, %28, %29 : vector<8x32xf32>
    %cst_21 = arith.constant 0.00999999977 : f32
    %31 = vector.broadcast %cst_21 : f32 to vector<8x32xf32>
    %32 = arith.mulf %31, %28 : vector<8x32xf32>
    %33 = arith.select %30, %28, %32 : vector<8x32xi1>, vector<8x32xf32>
    %c0_22 = arith.constant 0 : index
    %c0_23 = arith.constant 0 : index
    %34 = vector.load %arg11[%c0_22, %c0_23] : memref<8x32xf32, #tpu.memory_space<vmem>>, vector<8x32xf32>
    tpu.vector_store %arg11[%c0_22, %c0_23], %33 {strides = array<i32>} : memref<8x32xf32, #tpu.memory_space<vmem>>, vector<8x32xf32>,
    %c0_24 = arith.constant 0 : index
    %c0_25 = arith.constant 0 : index
    %35 = vector.load %arg9[%c0_24, %c0_25] : memref<128x32xf32, #tpu.memory_space<vmem>>, vector<128x32xf32>
    %cst_26 = arith.constant dense<0.000000e+00> : vector<8x32xf32>
    %36 = tpu.matmul %23, %35, %cst_26 {dimension_numbers = #tpu.dot_dimension_numbers<[1], [0], [0], [1], [0, 0, 1, 1], [], []>} : vector<8x128xf32>, vector<128x32xf32>, vector<8x32xf32> -> vector<8x32xf32>
    %c0_27 = arith.constant 0 : index
    %c0_28 = arith.constant 0 : index
    %37 = vector.load %arg10[%c0_27, %c0_28] : memref<1x32xf32, #tpu.memory_space<vmem>>, vector<1x32xf32>
    %38 = vector.broadcast %37 : vector<1x32xf32> to vector<8x32xf32>
    %39 = arith.addf %36, %38 : vector<8x32xf32>
    %cst_29 = arith.constant 0.000000e+00 : f32
    %40 = vector.broadcast %cst_29 : f32 to vector<8x32xf32>
    %41 = arith.cmpf ogt, %39, %40 : vector<8x32xf32>
    %cst_30 = arith.constant 0.00999999977 : f32
    %42 = vector.broadcast %cst_30 : f32 to vector<8x32xf32>
    %43 = arith.mulf %42, %39 : vector<8x32xf32>
    %44 = arith.select %41, %39, %43 : vector<8x32xi1>, vector<8x32xf32>
    %c0_31 = arith.constant 0 : index
    %c0_32 = arith.constant 0 : index
    %45 = vector.load %arg12[%c0_31, %c0_32] : memref<8x32xf32, #tpu.memory_space<vmem>>, vector<8x32xf32>
    tpu.vector_store %arg12[%c0_31, %c0_32], %44 {strides = array<i32>} : memref<8x32xf32, #tpu.memory_space<vmem>>, vector<8x32xf32>,
    return
  }
  func.func @transform_0(%arg0: i32) -> (i32, i32) {
    %c0_i32 = arith.constant 0 : i32
    %c0_i32_0 = arith.constant 0 : i32
    return %arg0, %c0_i32 : i32, i32
  }
  func.func @transform_1(%arg0: i32) -> (i32, i32) {
    %c0_i32 = arith.constant 0 : i32
    %c0_i32_0 = arith.constant 0 : i32
    return %arg0, %c0_i32 : i32, i32
  }
  func.func @transform_2(%arg0: i32) -> (i32, i32) {
    %c0_i32 = arith.constant 0 : i32
    %c0_i32_0 = arith.constant 0 : i32
    %c0_i32_1 = arith.constant 0 : i32
    return %c0_i32, %c0_i32_0 : i32, i32
  }
  func.func @transform_3(%arg0: i32) -> (i32, i32) {
    %c0_i32 = arith.constant 0 : i32
    %c0_i32_0 = arith.constant 0 : i32
    %c0_i32_1 = arith.constant 0 : i32
    return %c0_i32, %c0_i32_0 : i32, i32
  }
  func.func @transform_4(%arg0: i32) -> (i32, i32) {
    %c0_i32 = arith.constant 0 : i32
    %c0_i32_0 = arith.constant 0 : i32
    %c0_i32_1 = arith.constant 0 : i32
    return %c0_i32, %c0_i32_0 : i32, i32
  }
  func.func @transform_5(%arg0: i32) -> (i32, i32) {
    %c0_i32 = arith.constant 0 : i32
    %c0_i32_0 = arith.constant 0 : i32
    %c0_i32_1 = arith.constant 0 : i32
    return %c0_i32, %c0_i32_0 : i32, i32
  }
  func.func @transform_6(%arg0: i32) -> (i32, i32) {
    %c0_i32 = arith.constant 0 : i32
    %c0_i32_0 = arith.constant 0 : i32
    %c0_i32_1 = arith.constant 0 : i32
    return %c0_i32, %c0_i32_0 : i32, i32
  }
  func.func @transform_7(%arg0: i32) -> (i32, i32) {
    %c0_i32 = arith.constant 0 : i32
    %c0_i32_0 = arith.constant 0 : i32
    %c0_i32_1 = arith.constant 0 : i32
    return %c0_i32, %c0_i32_0 : i32, i32
  }
  func.func @transform_8(%arg0: i32) -> (i32, i32) {
    %c0_i32 = arith.constant 0 : i32
    %c0_i32_0 = arith.constant 0 : i32
    %c0_i32_1 = arith.constant 0 : i32
    return %c0_i32, %c0_i32_0 : i32, i32
  }
  func.func @transform_9(%arg0: i32) -> (i32, i32) {
    %c0_i32 = arith.constant 0 : i32
    %c0_i32_0 = arith.constant 0 : i32
    %c0_i32_1 = arith.constant 0 : i32
    return %c0_i32, %c0_i32_0 : i32, i32
  }
  func.func @transform_10(%arg0: i32) -> (i32, i32) {
    %c0_i32 = arith.constant 0 : i32
    %c0_i32_0 = arith.constant 0 : i32
    return %arg0, %c0_i32 : i32, i32
  }
  func.func @transform_11(%arg0: i32) -> (i32, i32) {
    %c0_i32 = arith.constant 0 : i32
    %c0_i32_0 = arith.constant 0 : i32
    return %arg0, %c0_i32 : i32, i32
  }
}

</mosaic_0001>

<llo_original>
// kernel: tpu_custom_call.1
$region0: #{tpu_custom_call.1}
  #allocation0 [shape = 'u32[]', space=smem, size = 0x4, offset = 0x4, fixed_abs, tag = 'smem constant byte address 0x4 - core index']
  #allocation1 [shape = 'u32[144,128]{1,0:T(1,128)}', space=vmem, size = 0x12000, scoped, tag = 'internal scratch']
  %s0 = inlined_call_operand.vmem [shape: f32[8,1], index: 0, kind: input, shape index: {}]
  %s1 = inlined_call_operand.vmem [shape: f32[8,4], index: 1, kind: input, shape index: {}]
  %s2 = inlined_call_operand.vmem [shape: f32[1,128], index: 2, kind: input, shape index: {}]
  %s3 = inlined_call_operand.vmem [shape: f32[1,128], index: 3, kind: input, shape index: {}]
  %s4 = inlined_call_operand.vmem [shape: f32[4,128], index: 4, kind: input, shape index: {}]
  %s5 = inlined_call_operand.vmem [shape: f32[1,128], index: 5, kind: input, shape index: {}]
  %s6 = inlined_call_operand.vmem [shape: f32[128,32], index: 6, kind: input, shape index: {}]
  %s7 = inlined_call_operand.vmem [shape: f32[1,32], index: 7, kind: input, shape index: {}]
  %s8 = inlined_call_operand.vmem [shape: f32[128,32], index: 8, kind: input, shape index: {}]
  %s9 = inlined_call_operand.vmem [shape: f32[1,32], index: 9, kind: input, shape index: {}]
  %s10 = inlined_call_operand.hbm [shape: f32[8,32], index: 10, kind: output, shape index: {0}]
  %s11 = inlined_call_operand.hbm [shape: f32[8,32], index: 11, kind: output, shape index: {1}]
  %12 = xla_tuple %s10, %s11
  %s13 = sld [smem:[#allocation0]]
  $region58: #{tpu_custom_call.1} parent=0
    _
  %s15 = ssub.s32 1, %s13
  %s16 = scalar_select 0, %s15, %s13
  $region1: #{tpu_custom_call.1} parent=0
    #allocation2 [shape = 'u8[4096]{0}', space=vmem, size = 0x1000, scoped, tag = 'output window, operand 0, single buffered']
    #allocation3 [shape = 's32[1]{0}', space=sflag, size = 0x4, scoped, tag = 'scoped memory for tpu_custom_call.1']
    #allocation4 [shape = 'u8[4096]{0}', space=vmem, size = 0x1000, scoped, tag = 'output window, operand 1, single buffered']
    #allocation5 [shape = 's32[1]{0}', space=sflag, size = 0x4, scoped, tag = 'scoped memory for tpu_custom_call.1']
    %17 = vsyncpa [#allocation3], 0
    %18 = vsyncpa [#allocation5], 0
    // Predicated region
    $region2: #{tpu_custom_call.1} parent=1 // pred_check
      _
    $region3: #{tpu_custom_call.1} parent=1 // pred_check_branch
      %20 = sbr.rel (0) target = $region5
    $region4: #{tpu_custom_call.1} parent=1 // pred_region
      _
    $region5: #{tpu_custom_call.1} parent=1 // pred_fallthru
      _
    // Predicated region
    $region6: #{tpu_custom_call.1} parent=1 // pred_check
      _
    $region7: #{tpu_custom_call.1} parent=1 // pred_check_branch
      %22 = sbr.rel (0) target = $region9
    $region8: #{tpu_custom_call.1} parent=1 // pred_region
      _
    $region9: #{tpu_custom_call.1} parent=1 // pred_fallthru
      _
    // Predicated region
    $region10: #{tpu_custom_call.1} parent=1 // pred_check
      _
    $region11: #{tpu_custom_call.1} parent=1 // pred_check_branch
      %24 = sbr.rel (0) target = $region13
    $region12: #{tpu_custom_call.1} parent=1 // pred_region
      _
    $region13: #{tpu_custom_call.1} parent=1 // pred_fallthru
      _
    // Predicated region
    $region14: #{tpu_custom_call.1} parent=1 // pred_check
      _
    $region15: #{tpu_custom_call.1} parent=1 // pred_check_branch
      %26 = sbr.rel (0) target = $region17
    $region16: #{tpu_custom_call.1} parent=1 // pred_region
      _
    $region17: #{tpu_custom_call.1} parent=1 // pred_fallthru
      _
    // Predicated region
    $region18: #{tpu_custom_call.1} parent=1 // pred_check
      _
    $region19: #{tpu_custom_call.1} parent=1 // pred_check_branch
      %28 = sbr.rel (0) target = $region21
    $region20: #{tpu_custom_call.1} parent=1 // pred_region
      _
    $region21: #{tpu_custom_call.1} parent=1 // pred_fallthru
      _
    // Predicated region
    $region22: #{tpu_custom_call.1} parent=1 // pred_check
      _
    $region23: #{tpu_custom_call.1} parent=1 // pred_check_branch
      %30 = sbr.rel (0) target = $region25
    $region24: #{tpu_custom_call.1} parent=1 // pred_region
      _
    $region25: #{tpu_custom_call.1} parent=1 // pred_fallthru
      _
    // Predicated region
    $region26: #{tpu_custom_call.1} parent=1 // pred_check
      _
    $region27: #{tpu_custom_call.1} parent=1 // pred_check_branch
      %32 = sbr.rel (0) target = $region29
    $region28: #{tpu_custom_call.1} parent=1 // pred_region
      _
    $region29: #{tpu_custom_call.1} parent=1 // pred_fallthru
      _
    // Predicated region
    $region30: #{tpu_custom_call.1} parent=1 // pred_check
      _
    $region31: #{tpu_custom_call.1} parent=1 // pred_check_branch
      %34 = sbr.rel (0) target = $region33
    $region32: #{tpu_custom_call.1} parent=1 // pred_region
      _
    $region33: #{tpu_custom_call.1} parent=1 // pred_fallthru
      _
    // Predicated region
    $region34: #{tpu_custom_call.1} parent=1 // pred_check
      _
    $region35: #{tpu_custom_call.1} parent=1 // pred_check_branch
      %36 = sbr.rel (0) target = $region37
    $region36: #{tpu_custom_call.1} parent=1 // pred_region
      _
    $region37: #{tpu_custom_call.1} parent=1 // pred_fallthru
      _
    // Predicated region
    $region38: #{tpu_custom_call.1} parent=1 // pred_check
      _
    $region39: #{tpu_custom_call.1} parent=1 // pred_check_branch
      %38 = sbr.rel (0) target = $region41
    $region40: #{tpu_custom_call.1} parent=1 // pred_region
      _
    $region41: #{tpu_custom_call.1} parent=1 // pred_fallthru
      _
    %v39 = vld [vmem:[%s0] sm:$0xff]
    %v40 = vld [vmem:[%s2] sm:$0x1]
    %42 = vset.pattern.permute.xlu0 0
    %43 = vperm.xlu0 %42, %v39
    %v44 = vpop.permute.xlu0 %43
    %v47 = vlaneseq
    %v48 = vshrl.u32 %v47, 7
    %v49 = vsub.s32 0, %v48
    %v50 = vrot.slane %v40, %v49
    %v52 = vmul.f32 %v44, %v50
    %v53 = vld [vmem:[%s3] sm:$0x1]
    %v55 = vlaneseq
    %v56 = vshrl.u32 %v55, 7
    %v57 = vsub.s32 0, %v56
    %v58 = vrot.slane %v53, %v57
    %v60 = vadd.f32 %v52, %v58
    %vm61 = vcmp.gt.f32.partialorder %v60, 0.0
    %v62 = vmul.f32 %v60, 0.01
    %v63 = vsel %vm61, %v60, %v62
    %v64 = vld [vmem:[%s1] sm:$0xff]
    %v65 = vld [vmem:[%s4] sm:$0xf]
    %v66 = vld [vmem:[%s5] sm:$0x1]
    %v68 = vlaneseq
    %v69 = vshrl.u32 %v68, 7
    %v70 = vsub.s32 0, %v69
    %v71 = vrot.slane %v66, %v70
    %vm73 = vcmask 31744
    %v75 = vsel %vm73, %v64, 0
    %vm77 = vcmask 1043456
    %v79 = vsel %vm77, %v65, 0
    %81 = vmatprep.subr.mxu0 0.0
    %82 = vmatpush1.msra.mxu0 %v79
    %83 = vmatprep.subr.mxu0 0.0
    %84 = vmatpush1.msra.mxu0 0.0
    %85 = vmatprep.subr.mxu0 0.0
    %86 = vmatpush1.msra.mxu0 0.0
    %87 = vmatprep.subr.mxu0 0.0
    %88 = vmatpush1.msra.mxu0 0.0
    %89 = vmatprep.subr.mxu0 0.0
    %90 = vmatpush1.msra.mxu0 0.0
    %91 = vmatprep.subr.mxu0 0.0
    %92 = vmatpush1.msra.mxu0 0.0
    %93 = vmatprep.subr.mxu0 0.0
    %94 = vmatpush1.msra.mxu0 0.0
    %95 = vmatprep.subr.mxu0 0.0
    %96 = vmatpush1.msra.mxu0 0.0
    %97 = vmatprep.subr.mxu0 0.0
    %98 = vmatpush1.msra.mxu0 0.0
    %99 = vmatprep.subr.mxu0 0.0
    %100 = vmatpush1.msra.mxu0 0.0
    %101 = vmatprep.subr.mxu0 0.0
    %102 = vmatpush1.msra.mxu0 0.0
    %103 = vmatprep.subr.mxu0 0.0
    %104 = vmatpush1.msra.mxu0 0.0
    %105 = vmatprep.subr.mxu0 0.0
    %106 = vmatpush1.msra.mxu0 0.0
    %107 = vmatprep.subr.mxu0 0.0
    %108 = vmatpush1.msra.mxu0 0.0
    %109 = vmatprep.subr.mxu0 0.0
    %110 = vmatpush1.msra.mxu0 0.0
    %111 = vmatprep.subr.mxu0 0.0
    %112 = vmatpush1.msra.mxu0 0.0
    %113 = vmatprep.subr.mxu0 0.0
    %114 = vmatpush1.msra.mxu0 0.0
    %115 = vmatprep.subr.mxu0 0.0
    %116 = vmatpush1.msra.mxu0 0.0
    %117 = vmatprep.subr.mxu0 0.0
    %118 = vmatpush1.msra.mxu0 0.0
    %119 = vmatprep.subr.mxu0 0.0
    %120 = vmatpush1.msra.mxu0 0.0
    %121 = vmatprep.subr.mxu0 0.0
    %122 = vmatpush1.msra.mxu0 0.0
    %123 = vmatprep.subr.mxu0 0.0
    %124 = vmatpush1.msra.mxu0 0.0
    %125 = vmatprep.subr.mxu0 0.0
    %126 = vmatpush1.msra.mxu0 0.0
    %127 = vmatprep.subr.mxu0 0.0
    %128 = vmatpush1.msra.mxu0 0.0
    %129 = vmatprep.subr.mxu0 0.0
    %130 = vmatpush1.msra.mxu0 0.0
    %131 = vmatprep.subr.mxu0 0.0
    %132 = vmatpush1.msra.mxu0 0.0
    %133 = vmatprep.subr.mxu0 0.0
    %134 = vmatpush1.msra.mxu0 0.0
    %135 = vmatprep.subr.mxu0 0.0
    %136 = vmatpush1.msra.mxu0 0.0
    %137 = vmatprep.subr.mxu0 0.0
    %138 = vmatpush1.msra.mxu0 0.0
    %139 = vmatprep.subr.mxu0 0.0
    %140 = vmatpush1.msra.mxu0 0.0
    %141 = vmatprep.subr.mxu0 0.0
    %142 = vmatpush1.msra.mxu0 0.0
    %143 = vmatprep.subr.mxu0 0.0
    %144 = vmatpush1.msra.mxu0 0.0
    %145 = vmatprep.mubr.f32.mxu0 0.0
    %146 = vmatmul.mubr.f32.gmra.mrb[0].mxu0 %v75
    %v147 = vpop.f32.mrb[0].mxu0
    %v148 = vadd.f32 %v71, %v147
    %v149 = vpop.f32.mrb[0].mxu0
    %150 = vdwg.mxu0
    %vm151 = vcmp.gt.f32.partialorder %v148, 0.0
    %v152 = vmul.f32 %v148, 0.01
    %v153 = vsel %vm151, %v148, %v152
    %v154 = vld [vmem:[%s6] sm:$0xff]
    %v155 = vld [vmem:[%s6 + $0x8] sm:$0xff]
    %v156 = vld [vmem:[%s6 + $0x10] sm:$0xff]
    %v157 = vld [vmem:[%s6 + $0x18] sm:$0xff]
    %v158 = vld [vmem:[%s6 + $0x20] sm:$0xff]
    %v159 = vld [vmem:[%s6 + $0x28] sm:$0xff]
    %v160 = vld [vmem:[%s6 + $0x30] sm:$0xff]
    %v161 = vld [vmem:[%s6 + $0x38] sm:$0xff]
    %v162 = vld [vmem:[%s6 + $0x40] sm:$0xff]
    %v163 = vld [vmem:[%s6 + $0x48] sm:$0xff]
    %v164 = vld [vmem:[%s6 + $0x50] sm:$0xff]
    %v165 = vld [vmem:[%s6 + $0x58] sm:$0xff]
    %v166 = vld [vmem:[%s6 + $0x60] sm:$0xff]
    %v167 = vld [vmem:[%s6 + $0x68] sm:$0xff]
    %v168 = vld [vmem:[%s6 + $0x70] sm:$0xff]
    %v169 = vld [vmem:[%s6 + $0x78] sm:$0xff]
    %v170 = vld [vmem:[%s7] sm:$0x1]
    %v172 = vlaneseq
    %v173 = vshrl.u32 %v172, 7
    %v174 = vsub.s32 0, %v173
    %v175 = vrot.slane %v170, %v174
    %177 = vmatprep.subr.mxu0 0.0
    %178 = vmatpush1.msra.mxu0 %v154
    %179 = vmatprep.subr.mxu0 0.0
    %180 = vmatpush1.msra.mxu0 %v155
    %181 = vmatprep.subr.mxu0 0.0
    %182 = vmatpush1.msra.mxu0 %v156
    %183 = vmatprep.subr.mxu0 0.0
    %184 = vmatpush1.msra.mxu0 %v157
    %185 = vmatprep.subr.mxu0 0.0
    %186 = vmatpush1.msra.mxu0 %v158
    %187 = vmatprep.subr.mxu0 0.0
    %188 = vmatpush1.msra.mxu0 %v159
    %189 = vmatprep.subr.mxu0 0.0
    %190 = vmatpush1.msra.mxu0 %v160
    %191 = vmatprep.subr.mxu0 0.0
    %192 = vmatpush1.msra.mxu0 %v161
    %193 = vmatprep.subr.mxu0 0.0
    %194 = vmatpush1.msra.mxu0 %v162
    %195 = vmatprep.subr.mxu0 0.0
    %196 = vmatpush1.msra.mxu0 %v163
    %197 = vmatprep.subr.mxu0 0.0
    %198 = vmatpush1.msra.mxu0 %v164
    %199 = vmatprep.subr.mxu0 0.0
    %200 = vmatpush1.msra.mxu0 %v165
    %201 = vmatprep.subr.mxu0 0.0
    %202 = vmatpush1.msra.mxu0 %v166
    %203 = vmatprep.subr.mxu0 0.0
    %204 = vmatpush1.msra.mxu0 %v167
    %205 = vmatprep.subr.mxu0 0.0
    %206 = vmatpush1.msra.mxu0 %v168
    %207 = vmatprep.subr.mxu0 0.0
    %208 = vmatpush1.msra.mxu0 %v169
    %209 = vmatprep.subr.mxu0 0.0
    %210 = vmatpush1.msra.mxu0 0.0
    %211 = vmatprep.subr.mxu0 0.0
    %212 = vmatpush1.msra.mxu0 0.0
    %213 = vmatprep.subr.mxu0 0.0
    %214 = vmatpush1.msra.mxu0 0.0
    %215 = vmatprep.subr.mxu0 0.0
    %216 = vmatpush1.msra.mxu0 0.0
    %217 = vmatprep.subr.mxu0 0.0
    %218 = vmatpush1.msra.mxu0 0.0
    %219 = vmatprep.subr.mxu0 0.0
    %220 = vmatpush1.msra.mxu0 0.0
    %221 = vmatprep.subr.mxu0 0.0
    %222 = vmatpush1.msra.mxu0 0.0
    %223 = vmatprep.subr.mxu0 0.0
    %224 = vmatpush1.msra.mxu0 0.0
    %225 = vmatprep.subr.mxu0 0.0
    %226 = vmatpush1.msra.mxu0 0.0
    %227 = vmatprep.subr.mxu0 0.0
    %228 = vmatpush1.msra.mxu0 0.0
    %229 = vmatprep.subr.mxu0 0.0
    %230 = vmatpush1.msra.mxu0 0.0
    %231 = vmatprep.subr.mxu0 0.0
    %232 = vmatpush1.msra.mxu0 0.0
    %233 = vmatprep.subr.mxu0 0.0
    %234 = vmatpush1.msra.mxu0 0.0
    %235 = vmatprep.subr.mxu0 0.0
    %236 = vmatpush1.msra.mxu0 0.0
    %237 = vmatprep.subr.mxu0 0.0
    %238 = vmatpush1.msra.mxu0 0.0
    %239 = vmatprep.subr.mxu0 0.0
    %240 = vmatpush1.msra.mxu0 0.0
    %241 = vmatprep.mubr.f32.mxu0 0.0
    %242 = vmatmul.mubr.f32.gmra.mrb[0].mxu0 %v63
    %v243 = vpop.f32.mrb[0].mxu0
    %v244 = vadd.f32 %v175, %v243
    %v245 = vpop.f32.mrb[0].mxu0
    %246 = vdwg.mxu0
    %vm247 = vcmp.gt.f32.partialorder %v244, 0.0
    %v248 = vmul.f32 %v244, 0.01
    %v249 = vsel %vm247, %v244, %v248
    %vm250 = vcmask 261120
    %251 = vst.msk [vmem:[#allocation2] sm:$0xff] %vm250, %v249
    %v252 = vld [vmem:[%s8] sm:$0xff]
    %v253 = vld [vmem:[%s8 + $0x8] sm:$0xff]
    %v254 = vld [vmem:[%s8 + $0x10] sm:$0xff]
    %v255 = vld [vmem:[%s8 + $0x18] sm:$0xff]
    %v256 = vld [vmem:[%s8 + $0x20] sm:$0xff]
    %v257 = vld [vmem:[%s8 + $0x28] sm:$0xff]
    %v258 = vld [vmem:[%s8 + $0x30] sm:$0xff]
    %v259 = vld [vmem:[%s8 + $0x38] sm:$0xff]
    %v260 = vld [vmem:[%s8 + $0x40] sm:$0xff]
    %v261 = vld [vmem:[%s8 + $0x48] sm:$0xff]
    %v262 = vld [vmem:[%s8 + $0x50] sm:$0xff]
    %v263 = vld [vmem:[%s8 + $0x58] sm:$0xff]
    %v264 = vld [vmem:[%s8 + $0x60] sm:$0xff]
    %v265 = vld [vmem:[%s8 + $0x68] sm:$0xff]
    %v266 = vld [vmem:[%s8 + $0x70] sm:$0xff]
    %v267 = vld [vmem:[%s8 + $0x78] sm:$0xff]
    %v268 = vld [vmem:[%s9] sm:$0x1]
    %v270 = vlaneseq
    %v271 = vshrl.u32 %v270, 7
    %v272 = vsub.s32 0, %v271
    %v273 = vrot.slane %v268, %v272
    %275 = vmatprep.subr.mxu0 0.0
    %276 = vmatpush1.msra.mxu0 %v252
    %277 = vmatprep.subr.mxu0 0.0
    %278 = vmatpush1.msra.mxu0 %v253
    %279 = vmatprep.subr.mxu0 0.0
    %280 = vmatpush1.msra.mxu0 %v254
    %281 = vmatprep.subr.mxu0 0.0
    %282 = vmatpush1.msra.mxu0 %v255
    %283 = vmatprep.subr.mxu0 0.0
    %284 = vmatpush1.msra.mxu0 %v256
    %285 = vmatprep.subr.mxu0 0.0
    %286 = vmatpush1.msra.mxu0 %v257
    %287 = vmatprep.subr.mxu0 0.0
    %288 = vmatpush1.msra.mxu0 %v258
    %289 = vmatprep.subr.mxu0 0.0
    %290 = vmatpush1.msra.mxu0 %v259
    %291 = vmatprep.subr.mxu0 0.0
    %292 = vmatpush1.msra.mxu0 %v260
    %293 = vmatprep.subr.mxu0 0.0
    %294 = vmatpush1.msra.mxu0 %v261
    %295 = vmatprep.subr.mxu0 0.0
    %296 = vmatpush1.msra.mxu0 %v262
    %297 = vmatprep.subr.mxu0 0.0
    %298 = vmatpush1.msra.mxu0 %v263
    %299 = vmatprep.subr.mxu0 0.0
    %300 = vmatpush1.msra.mxu0 %v264
    %301 = vmatprep.subr.mxu0 0.0
    %302 = vmatpush1.msra.mxu0 %v265
    %303 = vmatprep.subr.mxu0 0.0
    %304 = vmatpush1.msra.mxu0 %v266
    %305 = vmatprep.subr.mxu0 0.0
    %306 = vmatpush1.msra.mxu0 %v267
    %307 = vmatprep.subr.mxu0 0.0
    %308 = vmatpush1.msra.mxu0 0.0
    %309 = vmatprep.subr.mxu0 0.0
    %310 = vmatpush1.msra.mxu0 0.0
    %311 = vmatprep.subr.mxu0 0.0
    %312 = vmatpush1.msra.mxu0 0.0
    %313 = vmatprep.subr.mxu0 0.0
    %314 = vmatpush1.msra.mxu0 0.0
    %315 = vmatprep.subr.mxu0 0.0
    %316 = vmatpush1.msra.mxu0 0.0
    %317 = vmatprep.subr.mxu0 0.0
    %318 = vmatpush1.msra.mxu0 0.0
    %319 = vmatprep.subr.mxu0 0.0
    %320 = vmatpush1.msra.mxu0 0.0
    %321 = vmatprep.subr.mxu0 0.0
    %322 = vmatpush1.msra.mxu0 0.0
    %323 = vmatprep.subr.mxu0 0.0
    %324 = vmatpush1.msra.mxu0 0.0
    %325 = vmatprep.subr.mxu0 0.0
    %326 = vmatpush1.msra.mxu0 0.0
    %327 = vmatprep.subr.mxu0 0.0
    %328 = vmatpush1.msra.mxu0 0.0
    %329 = vmatprep.subr.mxu0 0.0
    %330 = vmatpush1.msra.mxu0 0.0
    %331 = vmatprep.subr.mxu0 0.0
    %332 = vmatpush1.msra.mxu0 0.0
    %333 = vmatprep.subr.mxu0 0.0
    %334 = vmatpush1.msra.mxu0 0.0
    %335 = vmatprep.subr.mxu0 0.0
    %336 = vmatpush1.msra.mxu0 0.0
    %337 = vmatprep.subr.mxu0 0.0
    %338 = vmatpush1.msra.mxu0 0.0
    %339 = vmatprep.mubr.f32.mxu0 0.0
    %340 = vmatmul.mubr.f32.gmra.mrb[0].mxu0 %v153
    %v341 = vpop.f32.mrb[0].mxu0
    %v342 = vadd.f32 %v273, %v341
    %v343 = vpop.f32.mrb[0].mxu0
    %344 = vdwg.mxu0
    %vm345 = vcmp.gt.f32.partialorder %v342, 0.0
    %v346 = vmul.f32 %v342, 0.01
    %v347 = vsel %vm345, %v342, %v346
    %348 = vst.msk [vmem:[#allocation4] sm:$0xff] %vm250, %v347
    // Predicated region
    $region42: #{tpu_custom_call.1} parent=1 // pred_check
      _
    $region43: #{tpu_custom_call.1} parent=1 // pred_check_branch
      %350 = sbr.rel (0) target = $region45
    $region44: #{tpu_custom_call.1} parent=1 // pred_region
      %s352 = ssub.s32 128, 128
      %353 = vsyncadd [#allocation3], %s352
      %s355 = sshll.u32 [#allocation2], 4
      %s356 = int_to_ptr.vmem [resolvable:$true] %s355
      %358 = dma.vmem_to_hbm [thread:$0]  %s356, 128, %s10, [#allocation3]
    $region45: #{tpu_custom_call.1} parent=1 // pred_fallthru
      _
    // Predicated region
    $region46: #{tpu_custom_call.1} parent=1 // pred_check
      _
    $region47: #{tpu_custom_call.1} parent=1 // pred_check_branch
      %360 = sbr.rel (0) target = $region49
    $region48: #{tpu_custom_call.1} parent=1 // pred_region
      %s362 = ssub.s32 128, 128
      %363 = vsyncadd [#allocation5], %s362
      %s365 = sshll.u32 [#allocation4], 4
      %s366 = int_to_ptr.vmem [resolvable:$true] %s365
      %368 = dma.vmem_to_hbm [thread:$0]  %s366, 128, %s11, [#allocation5]
    $region49: #{tpu_custom_call.1} parent=1 // pred_fallthru
      _
    // Predicated region
    $region50: #{tpu_custom_call.1} parent=1 // pred_check
      _
    $region51: #{tpu_custom_call.1} parent=1 // pred_check_branch
      %370 = sbr.rel (0) target = $region53
    $region52: #{tpu_custom_call.1} parent=1 // pred_region
      %371 = dma.done [#allocation3], 128
    $region53: #{tpu_custom_call.1} parent=1 // pred_fallthru
      _
    // Predicated region
    $region54: #{tpu_custom_call.1} parent=1 // pred_check
      _
    $region55: #{tpu_custom_call.1} parent=1 // pred_check_branch
      %373 = sbr.rel (0) target = $region57
    $region56: #{tpu_custom_call.1} parent=1 // pred_region
      %374 = dma.done [#allocation5], 128
    $region57: #{tpu_custom_call.1} parent=1 // pred_fallthru
      _
    %375 = vsyncpa [#allocation3], 1
    %376 = vsyncpa [#allocation5], 1

</llo_original>
